<compile_context>
chip_gen: v5e
topology: v5e:2x2
jax: 0.10.0
libtpu: 0.0.40
codegen_flags: <defaults>
</compile_context>

<pallas_src>
import jax
import jax.numpy as jnp
from jax.experimental import pallas as pl
from jax.experimental.pallas import tpu as pltpu

HIDDEN = 32       # hidden_size
EMBED = 16        # embed_size
TARGET = 20       # target_size
ONEHOT_PAD = 32   # one-hot width padded to a lane-friendly size >= TARGET
GATE_IN = ONEHOT_PAD + HIDDEN        # 64 : [ one-hot(token) | hx ]

# lane layout of the packed weight array (GATE_IN rows x WPACK_LANES lanes)
_GATES_LO = 0                        # [0, 128)  : folded gate weights (GATE_IN, 4H)
_WLIN_LO = 4 * HIDDEN                # [128,160) : fused final linear (2H, H)
_WS_LO = _WLIN_LO + HIDDEN           # [160,192) : rows [0,H)=W_s ; rows [H,H+4)=aux
WPACK_LANES = _WS_LO + HIDDEN        # 192


def _vmem():
    return pl.BlockSpec(memory_space=pltpu.MemorySpace.VMEM)


# --------------------------- shared per-step math ----------------------------

def _decoder_step(tok, state, cov, enc_ref, wpack_ref):
    """One decode step.

    tok   : (B, 1) int32 token ids
    state : (B, GATE_IN + H) = [ zeros(ONEHOT_PAD) | hx | cx ]
    cov   : (T*B, 1) coverage vector (flattened, row = t*B + b)
    enc_ref  : (T*B, 2H+1) ref = [ enc_feat | enc_out | mask ]
    wpack_ref: (GATE_IN, WPACK_LANES) packed weights ref
    """
    B = state.shape[0]
    H = HIDDEN
    TB = cov.shape[0]

    # ---- static views into the packed weights (cheap in-tile slices) --------
    w_gates = wpack_ref[:, _GATES_LO:_GATES_LO + 4 * H]      # (GATE_IN, 4H)
    w_lin = wpack_ref[:, _WLIN_LO:_WLIN_LO + H]              # (2H, H) fused final linear
    w_s = wpack_ref[0:H, _WS_LO:_WS_LO + H]                  # (H, H)
    aux = wpack_ref[H:H + 8, _WS_LO:_WS_LO + H]              # (8, H), sublane-aligned block
    b_sc = aux[0:1, :]       # b_s + b_c (folded at param-prep time)
    w_c = aux[1:2, :]        # coverage weight row
    b_lin = aux[2:3, :]      # final-linear bias
    v_row = aux[3:4, :]      # attention v weight as a row (v bias dropped: cancels in softmax)

    # ---- LSTM cell: embedding lookup + both input transforms in ONE matmul --
    # w_gates rows [0,TARGET) already hold (embedding @ W_ih + b_ih + b_hh); rows
    # [ONEHOT_PAD, GATE_IN) hold W_hh.  The one-hot lights only lanes < TARGET and
    # hx lives in lanes >= ONEHOT_PAD, so a plain add builds [one-hot | hx].
    col = jax.lax.broadcasted_iota(jnp.int32, (B, GATE_IN), 1)
    onehot = jnp.where(col == tok, 1.0, 0.0)                 # (B, GATE_IN), vectorized
    x_cat = onehot + state[:, 0:GATE_IN]
    gates = jnp.dot(x_cat, w_gates, preferred_element_type=jnp.float32)   # (B, 4H)

    cx = state[:, GATE_IN:GATE_IN + H]
    i_g = jax.nn.sigmoid(gates[:, 0 * H:1 * H])
    f_g = jax.nn.sigmoid(gates[:, 1 * H:2 * H])
    g_g = jnp.tanh(gates[:, 2 * H:3 * H])
    o_g = jax.nn.sigmoid(gates[:, 3 * H:4 * H])
    c_new = f_g * cx + i_g * g_g
    h_new = o_g * jnp.tanh(c_new)

    # ---- factored batch-membership matrix, built in-kernel from iota --------
    # G[r, c] = 1 iff flattened row r belongs to batch element c (r % B == c).
    # Float floor-division instead of integer % (exact at these magnitudes and
    # guaranteed to lower on the VPU).
    bf = float(B)
    rG = jax.lax.broadcasted_iota(jnp.int32, (TB, B), 0).astype(jnp.float32)
    cG = jax.lax.broadcasted_iota(jnp.int32, (TB, B), 1).astype(jnp.float32)
    G = jnp.where(rG - bf * jnp.floor(rG / bf) == cG, 1.0, 0.0)          # (TB, B)
    rT = jax.lax.broadcasted_iota(jnp.int32, (B, TB), 1).astype(jnp.float32)
    cT = jax.lax.broadcasted_iota(jnp.int32, (B, TB), 0).astype(jnp.float32)
    GT = jnp.where(rT - bf * jnp.floor(rT / bf) == cT, 1.0, 0.0)         # (B, TB)

    enc_feat = enc_ref[:, 0:H]
    enc_out = enc_ref[:, H:2 * H]
    mask = enc_ref[:, 2 * H:2 * H + 1]

    # ---- coverage attention on the flattened (t*b, .) layout ----------------
    dec_feat = jnp.dot(h_new, w_s, preferred_element_type=jnp.float32) + b_sc  # (B, H)
    dec_b = jnp.dot(G, dec_feat, preferred_element_type=jnp.float32)           # (TB, H) time-broadcast
    e = jnp.tanh(enc_feat + dec_b + cov * w_c)                                  # (TB, H)
    # scores via lane-reduce on VPU/XLU (off the serial MXU chain); v bias dropped.
    scores = jnp.sum(e * v_row, axis=1, keepdims=True)                          # (TB, 1)

    # softmax over time, per batch element.  A single global shift is mathematically
    # identical (shift-invariance); safe here since e is tanh-bounded and v is small.
    m = jnp.max(scores, axis=0, keepdims=True)
    ex = jnp.exp(scores - m)
    denom = jnp.dot(G, jnp.dot(GT, ex, preferred_element_type=jnp.float32),
                    preferred_element_type=jnp.float32)                         # per-batch sums
    align = ex / denom * mask                                                    # mask AFTER softmax

    content = jnp.dot(GT, align * enc_out, preferred_element_type=jnp.float32)  # (B, H)
    concat = jnp.concatenate([content, h_new], axis=-1)                          # (B, 2H)
    final = jnp.tanh(jnp.dot(concat, w_lin, preferred_element_type=jnp.float32) + b_lin)

    out_pack = jnp.concatenate([final, h_new, c_new], axis=-1)                   # (B, 3H) lane-dense
    new_state = jnp.concatenate(
        [jnp.zeros((B, ONEHOT_PAD), jnp.float32), h_new, c_new], axis=-1)
    new_cov = cov + align
    return out_pack, align, new_state, new_cov


# ------------------------------ kernels --------------------------------------

def fused_decoder_kernel(tok_ref, state_ref, cov_ref, enc_ref, wpack_ref,
                         out_ref, align_ref):
    out_val, align_val, _, _ = _decoder_step(
        tok_ref[...], state_ref[...], cov_ref[...], enc_ref, wpack_ref)
    out_ref[...] = out_val
    align_ref[...] = align_val


def fused_decoder_loop_kernel(tok_ref, init_state_ref, init_cov_ref, enc_ref, wpack_ref,
                              out_ref, align_ref, state_scr, cov_scr):
    step = pl.program_id(0)

    @pl.when(step == 0)
    def _():
        state_scr[...] = init_state_ref[...]
        cov_scr[...] = init_cov_ref[...]

    out_val, align_val, new_state, new_cov = _decoder_step(
        tok_ref[...], state_scr[...], cov_scr[...], enc_ref, wpack_ref)
    out_ref[...] = out_val
    align_ref[...] = align_val
    state_scr[...] = new_state
    cov_scr[...] = new_cov


# ------------------------------ wrappers --------------------------------------

@jax.jit
def decoder_forward(wpack, t_input, hx, cx, encoder_outputs, encoder_features,
                    coverage_vector, mask_tensor):
    """Single decode step (matches Decoder.forward)."""
    t_k, b, H = encoder_outputs.shape
    tb = t_k * b

    enc_pack = jnp.concatenate(
        [encoder_features.reshape(tb, H), encoder_outputs.reshape(tb, H),
         mask_tensor.reshape(tb, 1)], axis=-1)                        # (tb, 2H+1)
    cov_flat = coverage_vector.reshape(tb, 1)
    state = jnp.concatenate(
        [jnp.zeros((b, ONEHOT_PAD), jnp.float32), hx, cx], axis=-1)   # (b, GATE_IN+H)
    tok = t_input.astype(jnp.int32).reshape(b, 1)

    out_pack, align_flat = pl.pallas_call(
        fused_decoder_kernel,
        out_shape=(jax.ShapeDtypeStruct((b, 3 * H), jnp.float32),
                   jax.ShapeDtypeStruct((tb, 1), jnp.float32)),
        in_specs=[_vmem()] * 5,
        out_specs=(_vmem(), _vmem()),
    )(tok, state, cov_flat, enc_pack, wpack)

    final = out_pack[:, 0:H]
    h_new = out_pack[:, H:2 * H]
    c_new = out_pack[:, 2 * H:3 * H]
    align = align_flat.reshape(t_k, b, 1)
    next_cov = coverage_vector + align      # wrapper add (fused by XLA); no extra kernel output
    return final, h_new, c_new, align, next_cov


@jax.jit
def decoder_decode_sequence(wpack, t_inputs, hx, cx, encoder_outputs, encoder_features,
                            coverage_vector, mask_tensor):
    """Run the whole teacher-forced decode loop inside ONE pallas_call.

    Grid axis = decode steps ("arbitrary").  Weights + encoder pack are VMEM-resident
    (constant index_map); hx/cx and coverage are carried in VMEM scratch; per-step
    outputs are written through step-indexed out BlockSpecs.
    """
    n_steps, b = t_inputs.shape
    t_k, _, H = encoder_outputs.shape
    tb = t_k * b

    enc_pack = jnp.concatenate(
        [encoder_features.reshape(tb, H), encoder_outputs.reshape(tb, H),
         mask_tensor.reshape(tb, 1)], axis=-1)                        # (tb, 2H+1)
    cov0 = coverage_vector.reshape(tb, 1)
    state0 = jnp.concatenate(
        [jnp.zeros((b, ONEHOT_PAD), jnp.float32), hx, cx], axis=-1)   # (b, GATE_IN+H)
    toks = t_inputs.astype(jnp.int32).reshape(n_steps, b, 1)

    out_pack, align_all = pl.pallas_call(
        fused_decoder_loop_kernel,
        out_shape=(jax.ShapeDtypeStruct((n_steps, b, 3 * H), jnp.float32),
                   jax.ShapeDtypeStruct((n_steps, tb, 1), jnp.float32)),
        grid=(n_steps,),
        in_specs=[
            pl.BlockSpec((None, b, 1), lambda s: (s, 0, 0)),            # per-step token ids
            pl.BlockSpec((b, GATE_IN + HIDDEN), lambda s: (0, 0)),      # initial [pad|hx|cx]
            pl.BlockSpec((tb, 1), lambda s: (0, 0)),                    # initial coverage
            pl.BlockSpec((tb, 2 * HIDDEN + 1), lambda s: (0, 0)),       # [enc_feat|enc_out|mask]
            pl.BlockSpec((GATE_IN, WPACK_LANES), lambda s: (0, 0)),     # packed weights
        ],
        out_specs=(
            pl.BlockSpec((None, b, 3 * HIDDEN), lambda s: (s, 0, 0)),
            pl.BlockSpec((None, tb, 1), lambda s: (s, 0, 0)),
        ),
        scratch_shapes=[
            pltpu.VMEM((b, GATE_IN + HIDDEN), jnp.float32),             # carried hx/cx
            pltpu.VMEM((tb, 1), jnp.float32),                           # carried coverage
        ],
        compiler_params=pltpu.CompilerParams(
            dimension_semantics=("arbitrary",),
            vmem_limit_bytes=32 * 1024 * 1024,
        ),
    )(toks, state0, cov0, enc_pack, wpack)

    finals = out_pack[:, :, 0:H]
    h_all = out_pack[:, :, H:2 * H]
    c_all = out_pack[:, :, 2 * H:3 * H]
    aligns = align_all.reshape(n_steps, t_k, b, 1)
    return finals, h_all, c_all, aligns


# ---------------------------- params / reference ----------------------------

def init_params(key):
    ks = jax.random.split(key, 12)

    def u(k, shape, fan_in):
        bound = 1.0 / jnp.sqrt(jnp.float32(fan_in))
        return jax.random.uniform(k, shape, jnp.float32, -bound, bound)

    emb = jax.random.normal(ks[0], (TARGET, EMBED), jnp.float32) * 0.1
    emb = emb.at[0].set(0.0)                          # padding_idx=0
    return dict(
        embedding=emb,
        w_ih=u(ks[1], (EMBED, 4 * HIDDEN), HIDDEN),   # stored (in, out)
        w_hh=u(ks[2], (HIDDEN, 4 * HIDDEN), HIDDEN),
        b_lstm=u(ks[3], (1, 4 * HIDDEN), HIDDEN),     # combined b_ih + b_hh
        w_s=u(ks[4], (HIDDEN, HIDDEN), HIDDEN),
        b_s=u(ks[5], (1, HIDDEN), HIDDEN),
        w_c=u(ks[6], (1, HIDDEN), 1),                 # W_c: Linear(1, H)
        b_c=u(ks[7], (1, HIDDEN), 1),
        v_w=u(ks[8], (1, HIDDEN), HIDDEN),            # v: Linear(H, 1)
        v_b=u(ks[9], (1, 1), HIDDEN),
        w_lin=u(ks[10], (2 * HIDDEN, HIDDEN), 2 * HIDDEN),   # final linear (fused)
        b_lin=u(ks[11], (1, HIDDEN), 2 * HIDDEN),
    )


def prepare_params(params):
    """One-time parameter folding + packing into a single lane-dense VMEM array."""
    H = HIDDEN
    emb_gates = params['embedding'] @ params['w_ih'] + params['b_lstm']    # (TARGET, 4H)
    emb_gates = jnp.pad(emb_gates, ((0, ONEHOT_PAD - TARGET), (0, 0)))     # (ONEHOT_PAD, 4H)
    w_gates = jnp.concatenate([emb_gates, params['w_hh']], axis=0)         # (GATE_IN, 4H)

    wpack = jnp.zeros((GATE_IN, WPACK_LANES), jnp.float32)
    wpack = wpack.at[:, _GATES_LO:_GATES_LO + 4 * H].set(w_gates)
    wpack = wpack.at[:, _WLIN_LO:_WLIN_LO + H].set(params['w_lin'])
    wpack = wpack.at[0:H, _WS_LO:_WS_LO + H].set(params['w_s'])
    wpack = wpack.at[H + 0, _WS_LO:_WS_LO + H].set((params['b_s'] + params['b_c'])[0])
    wpack = wpack.at[H + 1, _WS_LO:_WS_LO + H].set(params['w_c'][0])
    wpack = wpack.at[H + 2, _WS_LO:_WS_LO + H].set(params['b_lin'][0])
    wpack = wpack.at[H + 3, _WS_LO:_WS_LO + H].set(params['v_w'][0])
    # v_b deliberately dropped: it cancels exactly under the softmax.
    return wpack


def reference_forward(params, t_input, hx, cx, enc_out, enc_feat, cov, mask):
    embed = jnp.take(params['embedding'], t_input, axis=0)
    gates = embed @ params['w_ih'] + hx @ params['w_hh'] + params['b_lstm'][0]
    i, f, g, o = jnp.split(gates, 4, axis=1)
    c_new = jax.nn.sigmoid(f) * cx + jax.nn.sigmoid(i) * jnp.tanh(g)
    h_new = jax.nn.sigmoid(o) * jnp.tanh(c_new)
    dec_feat = h_new @ params['w_s'] + params['b_s'][0]
    cov_feat = cov * params['w_c'][0] + params['b_c'][0]
    e = jnp.tanh(enc_feat + dec_feat[None] + cov_feat)
    scores = e @ params['v_w'][0] + params['v_b'][0, 0]
    align = jax.nn.softmax(scores, axis=0)[..., None] * mask
    next_cov = cov + align
    content = jnp.sum(align * enc_out, axis=0)
    concat = jnp.concatenate([content, h_new], axis=1)
    final = jnp.tanh(concat @ params['w_lin'] + params['b_lin'][0])
    return final, h_new, c_new, align, next_cov


# --------------------------------- main --------------------------------------

if __name__ == "__main__":
    B, T_K = 2, 8
    key = jax.random.PRNGKey(0)
    kp, k1, k2, k3, k4, k5, k6, k7 = jax.random.split(key, 8)

    params = init_params(kp)
    wpack = prepare_params(params)        # one-time folding / packing per model

    t_input = jax.random.randint(k1, (B,), 0, TARGET).at[0].set(0)  # exercise padding idx
    hx = jax.random.normal(k2, (B, HIDDEN), jnp.float32)
    cx = jax.random.normal(k3, (B, HIDDEN), jnp.float32)
    encoder_outputs = jax.random.normal(k4, (T_K, B, HIDDEN), jnp.float32)
    encoder_features = jax.random.normal(k5, (T_K, B, HIDDEN), jnp.float32)
    coverage_vector = jnp.abs(jax.random.normal(k6, (T_K, B, 1), jnp.float32)) * 0.1
    mask_tensor = jnp.ones((T_K, B, 1), jnp.float32).at[T_K - 2:, 1, 0].set(0.0)

    # ---- single-step check (Decoder.forward semantics) ----------------------
    outs = decoder_forward(wpack, t_input, hx, cx, encoder_outputs,
                           encoder_features, coverage_vector, mask_tensor)
    outs = jax.block_until_ready(outs)

    refs = reference_forward(params, t_input, hx, cx, encoder_outputs,
                             encoder_features, coverage_vector, mask_tensor)
    for o, r in zip(outs, refs):
        assert o.shape == r.shape, (o.shape, r.shape)
        assert jnp.allclose(o, r, atol=1e-5, rtol=1e-5), float(jnp.max(jnp.abs(o - r)))

    # ---- whole-loop-in-one-pallas_call check (teacher-forced decode) --------
    N_STEPS = 4
    t_inputs = jax.random.randint(k7, (N_STEPS, B), 0, TARGET)
    finals_k, h_k, c_k, aligns_k = jax.block_until_ready(
        decoder_decode_sequence(wpack, t_inputs, hx, cx, encoder_outputs,
                                encoder_features, coverage_vector, mask_tensor))

    hx_r, cx_r, cov_r = hx, cx, coverage_vector
    for s in range(N_STEPS):
        f_r, hx_r, cx_r, a_r, cov_r = reference_forward(
            params, t_inputs[s], hx_r, cx_r, encoder_outputs, encoder_features,
            cov_r, mask_tensor)
        assert jnp.allclose(finals_k[s], f_r, atol=3e-5, rtol=1e-5)
        assert jnp.allclose(h_k[s], hx_r, atol=3e-5, rtol=1e-5)
        assert jnp.allclose(c_k[s], cx_r, atol=3e-5, rtol=1e-5)
        assert jnp.allclose(aligns_k[s], a_r, atol=3e-5, rtol=1e-5)

    print("KERNEL_OK")
</pallas_src>

<mosaic_0001>
module attributes {stable_mosaic.version = 11 : i64} {
  func.func @fused_decoder_kernel(%arg0: memref<2x1xi32, #tpu.memory_space<vmem>>, %arg1: memref<2x96xf32, #tpu.memory_space<vmem>>, %arg2: memref<16x1xf32, #tpu.memory_space<vmem>>, %arg3: memref<16x65xf32, #tpu.memory_space<vmem>>, %arg4: memref<64x192xf32, #tpu.memory_space<vmem>>, %arg5: memref<2x96xf32, #tpu.memory_space<vmem>>, %arg6: memref<16x1xf32, #tpu.memory_space<vmem>>) attributes {dimension_semantics = [], scalar_prefetch = 0 : i64, scratch_operands = 0 : i64, tpu.core_type = #tpu.core_type<tc>} {
    %c0 = arith.constant 0 : index
    %c0_0 = arith.constant 0 : index
    %0 = vector.load %arg0[%c0, %c0_0] : memref<2x1xi32, #tpu.memory_space<vmem>>, vector<2x1xi32>
    %c0_1 = arith.constant 0 : index
    %c0_2 = arith.constant 0 : index
    %1 = vector.load %arg1[%c0_1, %c0_2] : memref<2x96xf32, #tpu.memory_space<vmem>>, vector<2x96xf32>
    %c0_3 = arith.constant 0 : index
    %c0_4 = arith.constant 0 : index
    %2 = vector.load %arg2[%c0_3, %c0_4] : memref<16x1xf32, #tpu.memory_space<vmem>>, vector<16x1xf32>
    %c0_5 = arith.constant 0 : index
    %c0_6 = arith.constant 0 : index
    %3 = vector.load %arg4[%c0_5, %c0_6] : memref<64x192xf32, #tpu.memory_space<vmem>>, vector<64x128xf32>
    %c0_7 = arith.constant 0 : index
    %c128 = arith.constant 128 : index
    %4 = vector.load %arg4[%c0_7, %c128] : memref<64x192xf32, #tpu.memory_space<vmem>>, vector<64x32xf32>
    %c0_8 = arith.constant 0 : index
    %c160 = arith.constant 160 : index
    %5 = vector.load %arg4[%c0_8, %c160] : memref<64x192xf32, #tpu.memory_space<vmem>>, vector<32x32xf32>
    %c32 = arith.constant 32 : index
    %c160_9 = arith.constant 160 : index
    %6 = vector.load %arg4[%c32, %c160_9] : memref<64x192xf32, #tpu.memory_space<vmem>>, vector<8x32xf32>
    %7 = vector.extract_strided_slice %6 {offsets = [0, 0], sizes = [1, 32], strides = [1, 1]} : vector<8x32xf32> to vector<1x32xf32>
    %8 = vector.extract_strided_slice %6 {offsets = [1, 0], sizes = [1, 32], strides = [1, 1]} : vector<8x32xf32> to vector<1x32xf32>
    %9 = vector.extract_strided_slice %6 {offsets = [2, 0], sizes = [1, 32], strides = [1, 1]} : vector<8x32xf32> to vector<1x32xf32>
    %10 = vector.extract_strided_slice %6 {offsets = [3, 0], sizes = [1, 32], strides = [1, 1]} : vector<8x32xf32> to vector<1x32xf32>
    %11 = tpu.iota {dimensions = array<i32: 1>} : vector<2x64xi32>
    %12 = vector.broadcast %0 : vector<2x1xi32> to vector<2x64xi32>
    %13 = arith.cmpi eq, %11, %12 : vector<2x64xi32>
    %cst = arith.constant 1.000000e+00 : f32
    %cst_10 = arith.constant 0.000000e+00 : f32
    %14 = vector.broadcast %cst : f32 to vector<2x64xf32>
    %15 = vector.broadcast %cst_10 : f32 to vector<2x64xf32>
    %16 = arith.select %13, %14, %15 : vector<2x64xi1>, vector<2x64xf32>
    %17 = vector.extract_strided_slice %1 {offsets = [0, 0], sizes = [2, 64], strides = [1, 1]} : vector<2x96xf32> to vector<2x64xf32>
    %18 = arith.addf %16, %17 : vector<2x64xf32>
    %cst_11 = arith.constant dense<0.000000e+00> : vector<2x128xf32>
    %19 = tpu.matmul %18, %3, %cst_11 {dimension_numbers = #tpu.dot_dimension_numbers<[1], [0], [0], [1], [0, 0, 1, 1], [], []>} : vector<2x64xf32>, vector<64x128xf32>, vector<2x128xf32> -> vector<2x128xf32>
    %20 = vector.extract_strided_slice %1 {offsets = [0, 64], sizes = [2, 32], strides = [1, 1]} : vector<2x96xf32> to vector<2x32xf32>
    %21 = vector.extract_strided_slice %19 {offsets = [0, 0], sizes = [2, 32], strides = [1, 1]} : vector<2x128xf32> to vector<2x32xf32>
    %22 = arith.negf %21 : vector<2x32xf32>
    %23 = math.exp %22 : vector<2x32xf32>
    %cst_12 = arith.constant 1.000000e+00 : f32
    %24 = vector.broadcast %cst_12 : f32 to vector<2x32xf32>
    %25 = arith.addf %24, %23 : vector<2x32xf32>
    %26 = arith.divf %24, %25 : vector<2x32xf32>
    %27 = vector.extract_strided_slice %19 {offsets = [0, 32], sizes = [2, 32], strides = [1, 1]} : vector<2x128xf32> to vector<2x32xf32>
    %28 = arith.negf %27 : vector<2x32xf32>
    %29 = math.exp %28 : vector<2x32xf32>
    %cst_13 = arith.constant 1.000000e+00 : f32
    %30 = vector.broadcast %cst_13 : f32 to vector<2x32xf32>
    %31 = arith.addf %30, %29 : vector<2x32xf32>
    %32 = arith.divf %30, %31 : vector<2x32xf32>
    %33 = vector.extract_strided_slice %19 {offsets = [0, 64], sizes = [2, 32], strides = [1, 1]} : vector<2x128xf32> to vector<2x32xf32>
    %34 = math.tanh %33 : vector<2x32xf32>
    %35 = vector.extract_strided_slice %19 {offsets = [0, 96], sizes = [2, 32], strides = [1, 1]} : vector<2x128xf32> to vector<2x32xf32>
    %36 = arith.negf %35 : vector<2x32xf32>
    %37 = math.exp %36 : vector<2x32xf32>
    %cst_14 = arith.constant 1.000000e+00 : f32
    %38 = vector.broadcast %cst_14 : f32 to vector<2x32xf32>
    %39 = arith.addf %38, %37 : vector<2x32xf32>
    %40 = arith.divf %38, %39 : vector<2x32xf32>
    %41 = arith.mulf %32, %20 : vector<2x32xf32>
    %42 = arith.mulf %26, %34 : vector<2x32xf32>
    %43 = arith.addf %41, %42 : vector<2x32xf32>
    %44 = math.tanh %43 : vector<2x32xf32>
    %45 = arith.mulf %40, %44 : vector<2x32xf32>
    %46 = tpu.iota {dimensions = array<i32: 0>} : vector<16x2xi32>
    %47 = arith.sitofp %46 : vector<16x2xi32> to vector<16x2xf32>
    %48 = tpu.iota {dimensions = array<i32: 1>} : vector<16x2xi32>
    %49 = arith.sitofp %48 : vector<16x2xi32> to vector<16x2xf32>
    %cst_15 = arith.constant 2.000000e+00 : f32
    %50 = vector.broadcast %cst_15 : f32 to vector<16x2xf32>
    %51 = arith.divf %47, %50 : vector<16x2xf32>
    %52 = math.floor %51 : vector<16x2xf32>
    %cst_16 = arith.constant 2.000000e+00 : f32
    %53 = vector.broadcast %cst_16 : f32 to vector<16x2xf32>
    %54 = arith.mulf %53, %52 : vector<16x2xf32>
    %55 = arith.subf %47, %54 : vector<16x2xf32>
    %56 = arith.cmpf oeq, %55, %49 : vector<16x2xf32>
    %cst_17 = arith.constant 1.000000e+00 : f32
    %cst_18 = arith.constant 0.000000e+00 : f32
    %57 = vector.broadcast %cst_17 : f32 to vector<16x2xf32>
    %58 = vector.broadcast %cst_18 : f32 to vector<16x2xf32>
    %59 = arith.select %56, %57, %58 : vector<16x2xi1>, vector<16x2xf32>
    %60 = tpu.iota {dimensions = array<i32: 1>} : vector<2x16xi32>
    %61 = arith.sitofp %60 : vector<2x16xi32> to vector<2x16xf32>
    %62 = tpu.iota {dimensions = array<i32: 0>} : vector<2x16xi32>
    %63 = arith.sitofp %62 : vector<2x16xi32> to vector<2x16xf32>
    %cst_19 = arith.constant 2.000000e+00 : f32
    %64 = vector.broadcast %cst_19 : f32 to vector<2x16xf32>
    %65 = arith.divf %61, %64 : vector<2x16xf32>
    %66 = math.floor %65 : vector<2x16xf32>
    %cst_20 = arith.constant 2.000000e+00 : f32
    %67 = vector.broadcast %cst_20 : f32 to vector<2x16xf32>
    %68 = arith.mulf %67, %66 : vector<2x16xf32>
    %69 = arith.subf %61, %68 : vector<2x16xf32>
    %70 = arith.cmpf oeq, %69, %63 : vector<2x16xf32>
    %cst_21 = arith.constant 1.000000e+00 : f32
    %cst_22 = arith.constant 0.000000e+00 : f32
    %71 = vector.broadcast %cst_21 : f32 to vector<2x16xf32>
    %72 = vector.broadcast %cst_22 : f32 to vector<2x16xf32>
    %73 = arith.select %70, %71, %72 : vector<2x16xi1>, vector<2x16xf32>
    %c0_23 = arith.constant 0 : index
    %c0_24 = arith.constant 0 : index
    %74 = vector.load %arg3[%c0_23, %c0_24] : memref<16x65xf32, #tpu.memory_space<vmem>>, vector<16x32xf32>
    %c0_25 = arith.constant 0 : index
    %c32_26 = arith.constant 32 : index
    %75 = vector.load %arg3[%c0_25, %c32_26] : memref<16x65xf32, #tpu.memory_space<vmem>>, vector<16x32xf32>
    %c0_27 = arith.constant 0 : index
    %c64 = arith.constant 64 : index
    %76 = vector.load %arg3[%c0_27, %c64] : memref<16x65xf32, #tpu.memory_space<vmem>>, vector<16x1xf32>
    %cst_28 = arith.constant dense<0.000000e+00> : vector<2x32xf32>
    %77 = tpu.matmul %45, %5, %cst_28 {dimension_numbers = #tpu.dot_dimension_numbers<[1], [0], [0], [1], [0, 0, 1, 1], [], []>} : vector<2x32xf32>, vector<32x32xf32>, vector<2x32xf32> -> vector<2x32xf32>
    %78 = vector.broadcast %7 : vector<1x32xf32> to vector<2x32xf32>
    %79 = arith.addf %77, %78 : vector<2x32xf32>
    %cst_29 = arith.constant dense<0.000000e+00> : vector<16x32xf32>
    %80 = tpu.matmul %59, %79, %cst_29 {dimension_numbers = #tpu.dot_dimension_numbers<[1], [0], [0], [1], [0, 0, 1, 1], [], []>} : vector<16x2xf32>, vector<2x32xf32>, vector<16x32xf32> -> vector<16x32xf32>
    %81 = arith.addf %74, %80 : vector<16x32xf32>
    %82 = vector.broadcast %2 : vector<16x1xf32> to vector<16x32xf32>
    %83 = vector.broadcast %8 : vector<1x32xf32> to vector<16x32xf32>
    %84 = arith.mulf %82, %83 : vector<16x32xf32>
    %85 = arith.addf %81, %84 : vector<16x32xf32>
    %86 = math.tanh %85 : vector<16x32xf32>
    %87 = vector.broadcast %10 : vector<1x32xf32> to vector<16x32xf32>
    %88 = arith.mulf %86, %87 : vector<16x32xf32>
    %cst_30 = arith.constant dense<0.000000e+00> : vector<16xf32>
    %89 = vector.multi_reduction <add>, %88, %cst_30 [1] : vector<16x32xf32> to vector<16xf32>
    %90 = vector.shape_cast %89 : vector<16xf32> to vector<16x1xf32>
    %cst_31 = arith.constant dense<0xFF800000> : vector<1xf32>
    %91 = vector.multi_reduction <maximumf>, %90, %cst_31 [0] : vector<16x1xf32> to vector<1xf32>
    %92 = vector.shape_cast %91 : vector<1xf32> to vector<1x1xf32>
    %93 = vector.broadcast %92 : vector<1x1xf32> to vector<16x1xf32>
    %94 = arith.subf %90, %93 : vector<16x1xf32>
    %95 = math.exp %94 : vector<16x1xf32>
    %cst_32 = arith.constant dense<0.000000e+00> : vector<2x1xf32>
    %96 = tpu.matmul %73, %95, %cst_32 {dimension_numbers = #tpu.dot_dimension_numbers<[1], [0], [0], [1], [0, 0, 1, 1], [], []>} : vector<2x16xf32>, vector<16x1xf32>, vector<2x1xf32> -> vector<2x1xf32>
    %cst_33 = arith.constant dense<0.000000e+00> : vector<16x1xf32>
    %97 = tpu.matmul %59, %96, %cst_33 {dimension_numbers = #tpu.dot_dimension_numbers<[1], [0], [0], [1], [0, 0, 1, 1], [], []>} : vector<16x2xf32>, vector<2x1xf32>, vector<16x1xf32> -> vector<16x1xf32>
    %98 = arith.divf %95, %97 : vector<16x1xf32>
    %99 = arith.mulf %98, %76 : vector<16x1xf32>
    %100 = vector.broadcast %99 : vector<16x1xf32> to vector<16x32xf32>
    %101 = arith.mulf %100, %75 : vector<16x32xf32>
    %cst_34 = arith.constant dense<0.000000e+00> : vector<2x32xf32>
    %102 = tpu.matmul %73, %101, %cst_34 {dimension_numbers = #tpu.dot_dimension_numbers<[1], [0], [0], [1], [0, 0, 1, 1], [], []>} : vector<2x16xf32>, vector<16x32xf32>, vector<2x32xf32> -> vector<2x32xf32>
    %103 = tpu.concatenate %102, %45 in 1 : vector<2x32xf32>, vector<2x32xf32> -> vector<2x64xf32>
    %cst_35 = arith.constant dense<0.000000e+00> : vector<2x32xf32>
    %104 = tpu.matmul %103, %4, %cst_35 {dimension_numbers = #tpu.dot_dimension_numbers<[1], [0], [0], [1], [0, 0, 1, 1], [], []>} : vector<2x64xf32>, vector<64x32xf32>, vector<2x32xf32> -> vector<2x32xf32>
    %105 = vector.broadcast %9 : vector<1x32xf32> to vector<2x32xf32>
    %106 = arith.addf %104, %105 : vector<2x32xf32>
    %107 = math.tanh %106 : vector<2x32xf32>
    %108 = tpu.concatenate %107, %45, %43 in 1 : vector<2x32xf32>, vector<2x32xf32>, vector<2x32xf32> -> vector<2x96xf32>
    %c0_36 = arith.constant 0 : index
    %c0_37 = arith.constant 0 : index
    %109 = vector.load %arg5[%c0_36, %c0_37] : memref<2x96xf32, #tpu.memory_space<vmem>>, vector<2x96xf32>
    tpu.vector_store %arg5[%c0_36, %c0_37], %108 {strides = array<i32>} : memref<2x96xf32, #tpu.memory_space<vmem>>, vector<2x96xf32>,
    %c0_38 = arith.constant 0 : index
    %c0_39 = arith.constant 0 : index
    %110 = vector.load %arg6[%c0_38, %c0_39] : memref<16x1xf32, #tpu.memory_space<vmem>>, vector<16x1xf32>
    tpu.vector_store %arg6[%c0_38, %c0_39], %99 {strides = array<i32>} : memref<16x1xf32, #tpu.memory_space<vmem>>, vector<16x1xf32>,
    return
  }
}

</mosaic_0001>

<llo_original>
// kernel: decoder_forward.1
$region0: #{decoder_forward.1}
  #allocation0 [shape = 'u32[]', space=smem, size = 0x4, offset = 0x4, fixed_abs, tag = 'smem constant byte address 0x4 - core index']
  #allocation1 [shape = 'u32[72,128]{1,0:T(1,128)}', space=vmem, size = 0x9000, scoped, tag = 'internal scratch']
  %s0 = inlined_call_operand.vmem [shape: s32[2,1], index: 0, kind: input, shape index: {}]
  %s1 = inlined_call_operand.vmem [shape: f32[2,96], index: 1, kind: input, shape index: {}]
  %s2 = inlined_call_operand.vmem [shape: f32[16,1], index: 2, kind: input, shape index: {}]
  %s3 = inlined_call_operand.vmem [shape: f32[16,65], index: 3, kind: input, shape index: {}]
  %s4 = inlined_call_operand.hbm [shape: f32[64,192], index: 4, kind: input, shape index: {}]
  %s5 = inlined_call_operand.vmem [shape: f32[2,96], index: 5, kind: output, shape index: {0}]
  %s6 = inlined_call_operand.vmem [shape: f32[16,1], index: 6, kind: output, shape index: {1}]
  %7 = xla_tuple %s5, %s6
  %s8 = sld [smem:[#allocation0]]
  $region42: #{decoder_forward.1} parent=0
    _
  %s10 = ssub.s32 1, %s8
  %s11 = scalar_select 0, %s10, %s8
  $region1: #{decoder_forward.1} parent=0
    #allocation2 [shape = 'u8[65536]{0}', space=vmem, size = 0x10000, scoped, tag = 'input window, operand 4, single buffered']
    #allocation3 [shape = 's32[1]{0}', space=sflag, size = 0x4, scoped, tag = 'scoped memory for decoder_forward.1']
    %12 = vsyncpa [#allocation3], 0
    // Predicated region
    $region2: #{decoder_forward.1} parent=1 // pred_check
      _
    $region3: #{decoder_forward.1} parent=1 // pred_check_branch
      %14 = sbr.rel (0) target = $region5
    $region4: #{decoder_forward.1} parent=1 // pred_region
      _
    $region5: #{decoder_forward.1} parent=1 // pred_fallthru
      _
    // Predicated region
    $region6: #{decoder_forward.1} parent=1 // pred_check
      _
    $region7: #{decoder_forward.1} parent=1 // pred_check_branch
      %16 = sbr.rel (0) target = $region9
    $region8: #{decoder_forward.1} parent=1 // pred_region
      _
    $region9: #{decoder_forward.1} parent=1 // pred_fallthru
      _
    // Predicated region
    $region10: #{decoder_forward.1} parent=1 // pred_check
      _
    $region11: #{decoder_forward.1} parent=1 // pred_check_branch
      %18 = sbr.rel (0) target = $region13
    $region12: #{decoder_forward.1} parent=1 // pred_region
      _
    $region13: #{decoder_forward.1} parent=1 // pred_fallthru
      _
    // Predicated region
    $region14: #{decoder_forward.1} parent=1 // pred_check
      _
    $region15: #{decoder_forward.1} parent=1 // pred_check_branch
      %20 = sbr.rel (0) target = $region17
    $region16: #{decoder_forward.1} parent=1 // pred_region
      _
    $region17: #{decoder_forward.1} parent=1 // pred_fallthru
      _
    // Predicated region
    $region18: #{decoder_forward.1} parent=1 // pred_check
      _
    $region19: #{decoder_forward.1} parent=1 // pred_check_branch
      %22 = sbr.rel (0) target = $region21
    $region20: #{decoder_forward.1} parent=1 // pred_region
      %24 = vsyncadd [#allocation3], 0
      %s25 = sshll.u32 %s4, 4
      %s26 = int_to_ptr.hbm [resolvable:$true] %s25
      %s27 = sshll.u32 [#allocation2], 4
      %s28 = int_to_ptr.vmem [resolvable:$true] %s27
      %33 = dma.hbm_to_vmem [thread:$0]  %s26, 2048, %s28, [#allocation3], 256, 256, 16
    $region21: #{decoder_forward.1} parent=1 // pred_fallthru
      _
    // Predicated region
    $region22: #{decoder_forward.1} parent=1 // pred_check
      _
    $region23: #{decoder_forward.1} parent=1 // pred_check_branch
      %35 = sbr.rel (0) target = $region25
    $region24: #{decoder_forward.1} parent=1 // pred_region
      %37 = dma.done [#allocation3], 2048
    $region25: #{decoder_forward.1} parent=1 // pred_fallthru
      _
    %v38 = vld [vmem:[%s0] sm:$0x3]
    %v39 = vld [vmem:[%s1] sm:$0x3]
    %v40 = vld [vmem:[%s2] sm:$0xff]
    %v41 = vld [vmem:[%s2 + $0x8] sm:$0xff]
    %v42 = vld [vmem:[#allocation2] sm:$0xff]
    %v43 = vld [vmem:[#allocation2 + $0x10] sm:$0xff]
    %v44 = vld [vmem:[#allocation2 + $0x20] sm:$0xff]
    %v45 = vld [vmem:[#allocation2 + $0x30] sm:$0xff]
    %v46 = vld [vmem:[#allocation2 + $0x40] sm:$0xff]
    %v47 = vld [vmem:[#allocation2 + $0x50] sm:$0xff]
    %v48 = vld [vmem:[#allocation2 + $0x60] sm:$0xff]
    %v49 = vld [vmem:[#allocation2 + $0x70] sm:$0xff]
    %v50 = vld [vmem:[#allocation2 + $0x8] sm:$0xff]
    %v51 = vld [vmem:[#allocation2 + $0x18] sm:$0xff]
    %v52 = vld [vmem:[#allocation2 + $0x28] sm:$0xff]
    %v53 = vld [vmem:[#allocation2 + $0x38] sm:$0xff]
    %v54 = vld [vmem:[#allocation2 + $0x48] sm:$0xff]
    %v55 = vld [vmem:[#allocation2 + $0x58] sm:$0xff]
    %v56 = vld [vmem:[#allocation2 + $0x68] sm:$0xff]
    %v57 = vld [vmem:[#allocation2 + $0x78] sm:$0xff]
    %v58 = vlaneseq
    %v59 = vand.u32 %v58, 127
    %60 = vset.pattern.permute.xlu0 0
    %61 = vperm.xlu0 %60, %v38
    %v62 = vpop.permute.xlu0 %61
    %vm63 = vcmp.eq.s32.totalorder %v59, %v62
    %v64 = vsel %vm63, 1.0, 0.0
    %v65 = vadd.f32 %v64, %v39
    %vm66 = vcmask 523264
    %v68 = vsel %vm66, %v65, 0
    %70 = vmatpush.msra.mxu0 0.0
    %71 = vmatpush.msra.mxu0 0.0
    %72 = vmatpush.msra.mxu0 0.0
    %73 = vmatpush.msra.mxu0 0.0
    %74 = vmatpush.msra.mxu0 0.0
    %75 = vmatpush.msra.mxu0 0.0
    %76 = vmatpush.msra.mxu0 0.0
    %77 = vmatpush.msra.mxu0 0.0
    %78 = vmatpush.msra.mxu0 %v49
    %79 = vmatpush.msra.mxu0 %v48
    %80 = vmatpush.msra.mxu0 %v47
    %81 = vmatpush.msra.mxu0 %v46
    %82 = vmatpush.msra.mxu0 %v45
    %83 = vmatpush.msra.mxu0 %v44
    %84 = vmatpush.msra.mxu0 %v43
    %85 = vmatpush.msra.mxu0 %v42
    %86 = vmatmul.f32.gmra.mxu0 %v68
    %v87 = vpop.f32.mrf.mxu0
    %v88 = vadd.f32 0.0, %v87
    %89 = vdwg.mxu0
    %v90 = vxor.u32 %v88, 2147483648
    %v91 = vmul.f32 %v90, 1.442695
    %v92 = vpow.pop %v91
    %v93 = vadd.f32 %v92, 1.0
    %v94 = vrcp.pop %v93
    %v95 = vmul.f32 %v93, %v94
    %v96 = vsub.f32 1.0, %v95
    %v97 = vmul.f32 %v94, %v96
    %v98 = vadd.f32 %v94, %v97
    %vm99 = vweird.f32 %v93
    %vm100 = vweird.f32 %v94
    %vm101 = vmor %vm99, %vm100
    %v102 = vsel %vm101, %v94, %v98
    %v103 = vand.u32 2147483647, %v93
    %vm104 = vcmp.eq.f32.partialorder %v103, 8.507059e+37
    %v105 = vand.u32 %v93, 2147483648
    %v106 = vor.u32 1.1754944e-38, %v105
    %v107 = vsel %vm104, %v106, %v102
    %v108 = vmul.f32 1.0, %v107
    %v109 = vtanh.pop %v88
    %111 = vrot.lane.b32.xlu0 %v39, 96
    %v112 = vpop.permute.xlu0 %111
    %v114 = vmul.f32 %v108, %v112
    %116 = vrot.lane.b32.xlu0 %v109, 64
    %v117 = vpop.permute.xlu0 %116
    %v119 = vmul.f32 %v108, %v117
    %121 = vrot.lane.b32.xlu0 %v119, 32
    %v122 = vpop.permute.xlu0 %121
    %v124 = vadd.f32 %v114, %v122
    %v125 = vtanh.pop %v124
    %127 = vrot.lane.b32.xlu0 %v125, 64
    %v128 = vpop.permute.xlu0 %127
    %v130 = vmul.f32 %v108, %v128
    %v131 = vlaneseq
    %v132 = vshrl.u32 %v131, 7
    %v133 = vadd.s32 %v132, 8
    %v134 = vcvt.s32.f32 %v132
    %v135 = vcvt.s32.f32 %v133
    %v136 = vcvt.s32.f32 %v59
    %v137 = vrcp.pop 2.0
    %v138 = vmul.f32 2.0, %v137
    %v139 = vsub.f32 1.0, %v138
    %v140 = vmul.f32 %v137, %v139
    %v141 = vadd.f32 %v137, %v140
    %vm142 = vweird.f32 %v137
    %v143 = vsel %vm142, %v137, %v141
    %v144 = vmul.f32 %v134, %v143
    %v145 = vmul.f32 %v135, %v143
    %v146 = vfloor.f32 %v144
    %v147 = vfloor.f32 %v145
    %v148 = vmul.f32 %v146, 2.0
    %v149 = vmul.f32 %v147, 2.0
    %v150 = vsub.f32 %v134, %v148
    %v151 = vsub.f32 %v135, %v149
    %vm152 = vcmp.eq.f32.partialorder %v150, %v136
    %vm153 = vcmp.eq.f32.partialorder %v151, %v136
    %v154 = vsel %vm152, 1.0, 0.0
    %v155 = vsel %vm153, 1.0, 0.0
    %v156 = vmul.f32 %v136, %v143
    %v157 = vfloor.f32 %v156
    %v158 = vmul.f32 %v157, 2.0
    %v159 = vsub.f32 %v136, %v158
    %vm160 = vcmp.eq.f32.partialorder %v159, %v134
    %v161 = vsel %vm160, 1.0, 0.0
    %v162 = vld [vmem:[%s3] sm:$0xff]
    %v163 = vld [vmem:[%s3 + $0x8] sm:$0xff]
    %v164 = vperm.slane %v54, 0
    %166 = vrot.lane.b32.xlu0 %v130, 32
    %v167 = vpop.permute.xlu0 %166
    %172 = vrot.lane.b32.xlu0 %v50, 96
    %v173 = vpop.permute.xlu0 %172
    %174 = vrot.lane.b32.xlu0 %v51, 96
    %v175 = vpop.permute.xlu0 %174
    %176 = vrot.lane.b32.xlu0 %v52, 96
    %v177 = vpop.permute.xlu0 %176
    %178 = vrot.lane.b32.xlu0 %v53, 96
    %v179 = vpop.permute.xlu0 %178
    %185 = vrot.lane.b32.xlu0 %v164, 96
    %v186 = vpop.permute.xlu0 %185
    %vm188 = vcmask 261120
    %v189 = vsel %vm188, %v167, 0
    %191 = vmatpush.msra.mxu0 0.0
    %192 = vmatpush.msra.mxu0 0.0
    %193 = vmatpush.msra.mxu0 0.0
    %194 = vmatpush.msra.mxu0 0.0
    %195 = vmatpush.msra.mxu0 0.0
    %196 = vmatpush.msra.mxu0 0.0
    %197 = vmatpush.msra.mxu0 0.0
    %198 = vmatpush.msra.mxu0 0.0
    %199 = vmatpush.msra.mxu0 0.0
    %200 = vmatpush.msra.mxu0 0.0
    %201 = vmatpush.msra.mxu0 0.0
    %202 = vmatpush.msra.mxu0 0.0
    %203 = vmatpush.msra.mxu0 %v179
    %204 = vmatpush.msra.mxu0 %v177
    %205 = vmatpush.msra.mxu0 %v175
    %206 = vmatpush.msra.mxu0 %v173
    %207 = vmatmul.f32.gmra.mxu0 %v189
    %v208 = vpop.f32.mrf.mxu0
    %v209 = vadd.f32 %v186, %v208
    %210 = vdwg.mxu0
    %vm211 = vcmask 15360
    %v213 = vsel %vm211, %v154, 0
    %v216 = vsel %vm211, %v155, 0
    %vm218 = vcmask 1041408
    %v220 = vsel %vm218, %v209, 0
    %222 = vmatpush.msra.mxu0 0.0
    %223 = vmatpush.msra.mxu0 0.0
    %224 = vmatpush.msra.mxu0 0.0
    %225 = vmatpush.msra.mxu0 0.0
    %226 = vmatpush.msra.mxu0 0.0
    %227 = vmatpush.msra.mxu0 0.0
    %228 = vmatpush.msra.mxu0 0.0
    %229 = vmatpush.msra.mxu0 0.0
    %230 = vmatpush.msra.mxu0 0.0
    %231 = vmatpush.msra.mxu0 0.0
    %232 = vmatpush.msra.mxu0 0.0
    %233 = vmatpush.msra.mxu0 0.0
    %234 = vmatpush.msra.mxu0 0.0
    %235 = vmatpush.msra.mxu0 0.0
    %236 = vmatpush.msra.mxu0 0.0
    %237 = vmatpush.msra.mxu0 %v220
    %238 = vmatmul.f32.gmra.mxu0 %v213
    %v239 = vpop.f32.mrf.mxu0
    %v240 = vadd.f32 0.0, %v239
    %241 = vmatmul.f32.gmra.mxu0 %v216
    %v242 = vpop.f32.mrf.mxu0
    %v243 = vadd.f32 0.0, %v242
    %244 = vdwg.mxu0
    %v245 = vadd.f32 %v162, %v240
    %v246 = vadd.f32 %v163, %v243
    %248 = vset.pattern.permute.xlu0 0
    %249 = vperm.xlu0 %248, %v40
    %v250 = vpop.permute.xlu0 %249
    %253 = vset.pattern.permute.xlu0 0
    %254 = vperm.xlu0 %253, %v41
    %v255 = vpop.permute.xlu0 %254
    %v257 = vperm.slane %v54, 1
    %v258 = vmul.f32 %v250, %v257
    %v259 = vmul.f32 %v255, %v257
    %262 = vrot.lane.b32.xlu0 %v258, 96
    %v263 = vpop.permute.xlu0 %262
    %264 = vrot.lane.b32.xlu0 %v259, 96
    %v265 = vpop.permute.xlu0 %264
    %v268 = vadd.f32 %v245, %v263
    %v269 = vadd.f32 %v246, %v265
    %v270 = vtanh.pop %v268
    %v271 = vtanh.pop %v269
    %v272 = vperm.slane %v54, 3
    %274 = vrot.lane.b32.xlu0 %v272, 96
    %v275 = vpop.permute.xlu0 %274
    %v277 = vmul.f32 %v270, %v275
    %v278 = vmul.f32 %v271, %v275
    %v279 = vsel %vm188, %v277, 0.0
    %280 = vadd.xlane.f32.xlu0 %v279
    %v281 = vpop.xlane.xlu0 %280
    %v282 = vsel %vm188, %v278, 0.0
    %283 = vadd.xlane.f32.xlu0 %v282
    %v284 = vpop.xlane.xlu0 %283
    %v285 = vmax.f32 %v281, %v284
    %v286 = vrot.slane %v285, 4
    %v287 = vmax.f32 %v285, %v286
    %v288 = vrot.slane %v287, 2
    %v289 = vmax.f32 %v287, %v288
    %v290 = vrot.slane %v289, 1
    %v291 = vmax.f32 %v289, %v290
    %v292 = vsub.f32 %v281, %v291
    %v293 = vsub.f32 %v284, %v291
    %v294 = vmul.f32 %v292, 1.442695
    %v295 = vpow.pop %v294
    %v296 = vmul.f32 %v293, 1.442695
    %v297 = vpow.pop %v296
    %vm298 = vcmask 130048
    %v300 = vsel %vm298, %v161, 0
    %302 = vmatpush.msra.mxu0 0.0
    %303 = vmatpush.msra.mxu0 0.0
    %304 = vmatpush.msra.mxu0 0.0
    %305 = vmatpush.msra.mxu0 0.0
    %306 = vmatpush.msra.mxu0 0.0
    %307 = vmatpush.msra.mxu0 0.0
    %308 = vmatpush.msra.mxu0 0.0
    %309 = vmatpush.msra.mxu0 0.0
    %310 = vmatpush.msra.mxu0 0.0
    %311 = vmatpush.msra.mxu0 0.0
    %312 = vmatpush.msra.mxu0 0.0
    %313 = vmatpush.msra.mxu0 0.0
    %314 = vmatpush.msra.mxu0 0.0
    %315 = vmatpush.msra.mxu0 0.0
    %316 = vmatpush.msra.mxu0 %v297
    %317 = vmatpush.msra.mxu0 %v295
    %318 = vmatmul.f32.gmra.mxu0 %v300
    %v319 = vpop.f32.mrf.mxu0
    %v320 = vadd.f32 0.0, %v319
    %321 = vdwg.mxu0
    %v323 = vsel %vm218, %v320, 0
    %325 = vmatpush.msra.mxu0 0.0
    %326 = vmatpush.msra.mxu0 0.0
    %327 = vmatpush.msra.mxu0 0.0
    %328 = vmatpush.msra.mxu0 0.0
    %329 = vmatpush.msra.mxu0 0.0
    %330 = vmatpush.msra.mxu0 0.0
    %331 = vmatpush.msra.mxu0 0.0
    %332 = vmatpush.msra.mxu0 0.0
    %333 = vmatpush.msra.mxu0 0.0
    %334 = vmatpush.msra.mxu0 0.0
    %335 = vmatpush.msra.mxu0 0.0
    %336 = vmatpush.msra.mxu0 0.0
    %337 = vmatpush.msra.mxu0 0.0
    %338 = vmatpush.msra.mxu0 0.0
    %339 = vmatpush.msra.mxu0 0.0
    %340 = vmatpush.msra.mxu0 %v323
    %341 = vmatmul.f32.gmra.mxu0 %v213
    %v342 = vpop.f32.mrf.mxu0
    %v343 = vadd.f32 0.0, %v342
    %344 = vmatmul.f32.gmra.mxu0 %v216
    %v345 = vpop.f32.mrf.mxu0
    %v346 = vadd.f32 0.0, %v345
    %347 = vdwg.mxu0
    %v348 = vrcp.pop %v343
    %v349 = vmul.f32 %v343, %v348
    %v350 = vsub.f32 1.0, %v349
    %v351 = vmul.f32 %v348, %v350
    %v352 = vadd.f32 %v348, %v351
    %vm353 = vweird.f32 %v343
    %vm354 = vweird.f32 %v348
    %vm355 = vmor %vm353, %vm354
    %v356 = vsel %vm355, %v348, %v352
    %v357 = vand.u32 2147483647, %v343
    %vm358 = vcmp.eq.f32.partialorder %v357, 8.507059e+37
    %v359 = vand.u32 %v343, 2147483648
    %v360 = vor.u32 1.1754944e-38, %v359
    %v361 = vsel %vm358, %v360, %v356
    %v362 = vmul.f32 %v295, %v361
    %v363 = vrcp.pop %v346
    %v364 = vmul.f32 %v346, %v363
    %v365 = vsub.f32 1.0, %v364
    %v366 = vmul.f32 %v363, %v365
    %v367 = vadd.f32 %v363, %v366
    %vm368 = vweird.f32 %v346
    %vm369 = vweird.f32 %v363
    %vm370 = vmor %vm368, %vm369
    %v371 = vsel %vm370, %v363, %v367
    %v372 = vand.u32 2147483647, %v346
    %vm373 = vcmp.eq.f32.partialorder %v372, 8.507059e+37
    %v374 = vand.u32 %v346, 2147483648
    %v375 = vor.u32 1.1754944e-38, %v374
    %v376 = vsel %vm373, %v375, %v371
    %v377 = vmul.f32 %v297, %v376
    %380 = vrot.lane.b32.xlu0 %v162, 64
    %v381 = vpop.permute.xlu0 %380
    %382 = vrot.lane.b32.xlu0 %v163, 64
    %v383 = vpop.permute.xlu0 %382
    %v386 = vmul.f32 %v362, %v381
    %v387 = vmul.f32 %v377, %v383
    %389 = vset.pattern.permute.xlu0 0
    %390 = vperm.xlu0 %389, %v386
    %v391 = vpop.permute.xlu0 %390
    %394 = vset.pattern.permute.xlu0 0
    %395 = vperm.xlu0 %394, %v387
    %v396 = vpop.permute.xlu0 %395
    %v398 = vmul.f32 %v391, %v162
    %v399 = vmul.f32 %v396, %v163
    %402 = vrot.lane.b32.xlu0 %v398, 96
    %v403 = vpop.permute.xlu0 %402
    %404 = vrot.lane.b32.xlu0 %v399, 96
    %v405 = vpop.permute.xlu0 %404
    %408 = vmatpush.msra.mxu0 0.0
    %409 = vmatpush.msra.mxu0 0.0
    %410 = vmatpush.msra.mxu0 0.0
    %411 = vmatpush.msra.mxu0 0.0
    %412 = vmatpush.msra.mxu0 0.0
    %413 = vmatpush.msra.mxu0 0.0
    %414 = vmatpush.msra.mxu0 0.0
    %415 = vmatpush.msra.mxu0 0.0
    %416 = vmatpush.msra.mxu0 0.0
    %417 = vmatpush.msra.mxu0 0.0
    %418 = vmatpush.msra.mxu0 0.0
    %419 = vmatpush.msra.mxu0 0.0
    %420 = vmatpush.msra.mxu0 0.0
    %421 = vmatpush.msra.mxu0 0.0
    %422 = vmatpush.msra.mxu0 %v405
    %423 = vmatpush.msra.mxu0 %v403
    %424 = vmatmul.f32.gmra.mxu0 %v300
    %v425 = vpop.f32.mrf.mxu0
    %v426 = vadd.f32 0.0, %v425
    %427 = vdwg.mxu0
    %428 = vrot.lane.b32.xlu0 %v130, 64
    %v429 = vpop.permute.xlu0 %428
    %v431 = vsel %vm188, %v426, %v429
    %v432 = vperm.slane %v54, 2
    %434 = vrot.lane.b32.xlu0 %v432, 96
    %v435 = vpop.permute.xlu0 %434
    %v438 = vsel %vm66, %v431, 0
    %440 = vmatpush.msra.mxu0 0.0
    %441 = vmatpush.msra.mxu0 0.0
    %442 = vmatpush.msra.mxu0 0.0
    %443 = vmatpush.msra.mxu0 0.0
    %444 = vmatpush.msra.mxu0 0.0
    %445 = vmatpush.msra.mxu0 0.0
    %446 = vmatpush.msra.mxu0 0.0
    %447 = vmatpush.msra.mxu0 0.0
    %448 = vmatpush.msra.mxu0 %v57
    %449 = vmatpush.msra.mxu0 %v56
    %450 = vmatpush.msra.mxu0 %v55
    %451 = vmatpush.msra.mxu0 %v54
    %452 = vmatpush.msra.mxu0 %v53
    %453 = vmatpush.msra.mxu0 %v52
    %454 = vmatpush.msra.mxu0 %v51
    %455 = vmatpush.msra.mxu0 %v50
    %456 = vmatmul.f32.gmra.mxu0 %v438
    %v457 = vpop.f32.mrf.mxu0
    %v458 = vadd.f32 %v435, %v457
    %459 = vdwg.mxu0
    %v460 = vtanh.pop %v458
    %462 = vrot.lane.b32.xlu0 %v124, 32
    %v463 = vpop.permute.xlu0 %462
    %v465 = vsel %vm188, %v460, %v429
    %v466 = vsel %vm66, %v465, %v463
    %vm467 = vcmask 779264
    %468 = vst.msk [vmem:[%s5] sm:$0x3] %vm467, %v466
    %vm469 = vcmask 7168
    %470 = vst.msk [vmem:[%s6] sm:$0xff] %vm469, %v386
    %471 = vst.msk [vmem:[%s6 + $0x8] sm:$0xff] %vm469, %v387
    // Predicated region
    $region26: #{decoder_forward.1} parent=1 // pred_check
      _
    $region27: #{decoder_forward.1} parent=1 // pred_check_branch
      %473 = sbr.rel (0) target = $region29
    $region28: #{decoder_forward.1} parent=1 // pred_region
      _
    $region29: #{decoder_forward.1} parent=1 // pred_fallthru
      _
    // Predicated region
    $region30: #{decoder_forward.1} parent=1 // pred_check
      _
    $region31: #{decoder_forward.1} parent=1 // pred_check_branch
      %475 = sbr.rel (0) target = $region33
    $region32: #{decoder_forward.1} parent=1 // pred_region
      _
    $region33: #{decoder_forward.1} parent=1 // pred_fallthru
      _
    // Predicated region
    $region34: #{decoder_forward.1} parent=1 // pred_check
      _
    $region35: #{decoder_forward.1} parent=1 // pred_check_branch
      %477 = sbr.rel (0) target = $region37
    $region36: #{decoder_forward.1} parent=1 // pred_region
      _
    $region37: #{decoder_forward.1} parent=1 // pred_fallthru
      _
    // Predicated region
    $region38: #{decoder_forward.1} parent=1 // pred_check
      _
    $region39: #{decoder_forward.1} parent=1 // pred_check_branch
      %479 = sbr.rel (0) target = $region41
    $region40: #{decoder_forward.1} parent=1 // pred_region
      _
    $region41: #{decoder_forward.1} parent=1 // pred_fallthru
      _
    %480 = vsyncpa [#allocation3], 1

</llo_original>
